<compile_context>
chip_gen: v5e
topology: v5e:2x2
jax: 0.10.0
libtpu: 0.0.40
codegen_flags: <defaults>
</compile_context>

<pallas_src>
import jax
import jax.numpy as jnp
from jax.experimental import pallas as pl
from jax.experimental.pallas import tpu as pltpu


def mlp_kernel(x_ref, w1_ref, b1_ref, w2_ref, b2_ref, o_ref):
    x = x_ref[...]                                                    # (TB, F)
    h1 = jnp.dot(x, w1_ref[...],
                 preferred_element_type=jnp.float32) + b1_ref[...]    # (TB, H1)
    h1 = jnp.maximum(h1, 0.0)                                         # relu
    h2 = jnp.dot(h1, w2_ref[...],
                 preferred_element_type=jnp.float32) + b2_ref[...]    # (TB, H2)
    h2 = jnp.maximum(h2, 0.0)                                         # relu
    o_ref[...] = jax.nn.sigmoid(h2)                                   # sigmoid


def net_forward(x, w1, b1, w2, b2, *, tb=128):
    """sigmoid(relu(relu(x@w1+b1)@w2+b2)).squeeze(), batch-tiled over x rows."""
    B, F = x.shape
    H1 = w1.shape[1]
    H2 = w2.shape[1]

    # Batch tile: multiple of 8 (f32 sublane), no bigger than the padded batch.
    tb = min(tb, max(8, ((B + 7) // 8) * 8))
    num_tiles = pl.cdiv(B, tb)
    Bp = num_tiles * tb
    if Bp != B:
        x = jnp.pad(x, ((0, Bp - B), (0, 0)))

    out = pl.pallas_call(
        mlp_kernel,
        out_shape=jax.ShapeDtypeStruct((Bp, H2), jnp.float32),
        grid=(num_tiles,),
        in_specs=[
            pl.BlockSpec((tb, F), lambda i: (i, 0)),     # x: new tile per step
            pl.BlockSpec((F, H1), lambda i: (0, 0)),     # w1: VMEM-resident
            pl.BlockSpec((1, H1), lambda i: (0, 0)),     # b1: VMEM-resident
            pl.BlockSpec((H1, H2), lambda i: (0, 0)),    # w2: VMEM-resident
            pl.BlockSpec((1, H2), lambda i: (0, 0)),     # b2: VMEM-resident
        ],
        out_specs=pl.BlockSpec((tb, H2), lambda i: (i, 0)),
        compiler_params=pltpu.CompilerParams(
            dimension_semantics=("parallel",)),          # shard tiles across TCs (v7x)
    )(x, w1, b1, w2, b2)

    out = out[:B]
    # torch .squeeze(): drop all size-1 dims (glue, stays in plain JAX).
    return jnp.squeeze(out)


if __name__ == "__main__":
    # in_features must make in_features*0.25 / *0.125 integral; use 128.
    # Batch is chosen large enough to exercise the batch tiling (grid of 2).
    B = 256
    IN_FEATURES = 128
    H1 = IN_FEATURES // 4      # fc1 out = in_features * 0.25
    H2 = IN_FEATURES // 8      # fc2 out = in_features * 0.125

    key = jax.random.PRNGKey(0)
    kx, kw1, kb1, kw2, kb2 = jax.random.split(key, 5)

    x = jax.random.normal(kx, (B, IN_FEATURES), dtype=jnp.float32)

    # Deterministic parameter init (PyTorch-Linear-like uniform bounds),
    # weights stored pre-transposed as (F_in, F_out).
    bound1 = 1.0 / (IN_FEATURES ** 0.5)
    w1 = jax.random.uniform(kw1, (IN_FEATURES, H1), jnp.float32, -bound1, bound1)
    b1 = jax.random.uniform(kb1, (1, H1), jnp.float32, -bound1, bound1)

    bound2 = 1.0 / (H1 ** 0.5)
    w2 = jax.random.uniform(kw2, (H1, H2), jnp.float32, -bound2, bound2)
    b2 = jax.random.uniform(kb2, (1, H2), jnp.float32, -bound2, bound2)

    out = net_forward(x, w1, b1, w2, b2)
    out = jax.block_until_ready(out)

    # Sanity-check against a pure-JAX reference of the same forward pass.
    ref = jax.nn.sigmoid(
        jnp.maximum(jnp.maximum(x @ w1 + b1, 0.0) @ w2 + b2, 0.0)).squeeze()
    assert out.shape == ref.shape
    assert jnp.allclose(out, ref, atol=1e-5, rtol=1e-5)

    print("KERNEL_OK")
</pallas_src>

<mosaic_0001>
module attributes {stable_mosaic.version = 11 : i64} {
  func.func @mlp_kernel(%arg0: i32, %arg1: memref<128x128xf32, #tpu.memory_space<vmem>>, %arg2: memref<128x32xf32, #tpu.memory_space<vmem>>, %arg3: memref<1x32xf32, #tpu.memory_space<vmem>>, %arg4: memref<32x16xf32, #tpu.memory_space<vmem>>, %arg5: memref<1x16xf32, #tpu.memory_space<vmem>>, %arg6: memref<128x16xf32, #tpu.memory_space<vmem>>) attributes {dimension_semantics = [#tpu.dimension_semantics<parallel>], iteration_bounds = array<i64: 2>, scalar_prefetch = 0 : i64, scratch_operands = 0 : i64, tpu.core_type = #tpu.core_type<tc>, window_params = [{transform_indices = @transform_0, window_bounds = array<i64: 128, 128>}, {pipeline_mode = #tpu.pipeline_mode<synchronous>, transform_indices = @transform_1, window_bounds = array<i64: 128, 32>}, {pipeline_mode = #tpu.pipeline_mode<synchronous>, transform_indices = @transform_2, window_bounds = array<i64: 1, 32>}, {pipeline_mode = #tpu.pipeline_mode<synchronous>, transform_indices = @transform_3, window_bounds = array<i64: 32, 16>}, {pipeline_mode = #tpu.pipeline_mode<synchronous>, transform_indices = @transform_4, window_bounds = array<i64: 1, 16>}, {transform_indices = @transform_5, window_bounds = array<i64: 128, 16>}]} {
    %c0 = arith.constant 0 : index
    %c0_0 = arith.constant 0 : index
    %0 = vector.load %arg1[%c0, %c0_0] : memref<128x128xf32, #tpu.memory_space<vmem>>, vector<128x128xf32>
    %c0_1 = arith.constant 0 : index
    %c0_2 = arith.constant 0 : index
    %1 = vector.load %arg2[%c0_1, %c0_2] : memref<128x32xf32, #tpu.memory_space<vmem>>, vector<128x32xf32>
    %cst = arith.constant dense<0.000000e+00> : vector<128x32xf32>
    %2 = tpu.matmul %0, %1, %cst {dimension_numbers = #tpu.dot_dimension_numbers<[1], [0], [0], [1], [0, 0, 1, 1], [], []>} : vector<128x128xf32>, vector<128x32xf32>, vector<128x32xf32> -> vector<128x32xf32>
    %c0_3 = arith.constant 0 : index
    %c0_4 = arith.constant 0 : index
    %3 = vector.load %arg3[%c0_3, %c0_4] : memref<1x32xf32, #tpu.memory_space<vmem>>, vector<1x32xf32>
    %4 = vector.broadcast %3 : vector<1x32xf32> to vector<128x32xf32>
    %5 = arith.addf %2, %4 : vector<128x32xf32>
    %cst_5 = arith.constant 0.000000e+00 : f32
    %6 = vector.broadcast %cst_5 : f32 to vector<128x32xf32>
    %7 = arith.maximumf %5, %6 : vector<128x32xf32>
    %c0_6 = arith.constant 0 : index
    %c0_7 = arith.constant 0 : index
    %8 = vector.load %arg4[%c0_6, %c0_7] : memref<32x16xf32, #tpu.memory_space<vmem>>, vector<32x16xf32>
    %cst_8 = arith.constant dense<0.000000e+00> : vector<128x16xf32>
    %9 = tpu.matmul %7, %8, %cst_8 {dimension_numbers = #tpu.dot_dimension_numbers<[1], [0], [0], [1], [0, 0, 1, 1], [], []>} : vector<128x32xf32>, vector<32x16xf32>, vector<128x16xf32> -> vector<128x16xf32>
    %c0_9 = arith.constant 0 : index
    %c0_10 = arith.constant 0 : index
    %10 = vector.load %arg5[%c0_9, %c0_10] : memref<1x16xf32, #tpu.memory_space<vmem>>, vector<1x16xf32>
    %11 = vector.broadcast %10 : vector<1x16xf32> to vector<128x16xf32>
    %12 = arith.addf %9, %11 : vector<128x16xf32>
    %cst_11 = arith.constant 0.000000e+00 : f32
    %13 = vector.broadcast %cst_11 : f32 to vector<128x16xf32>
    %14 = arith.maximumf %12, %13 : vector<128x16xf32>
    %15 = arith.negf %14 : vector<128x16xf32>
    %16 = math.exp %15 : vector<128x16xf32>
    %cst_12 = arith.constant 1.000000e+00 : f32
    %17 = vector.broadcast %cst_12 : f32 to vector<128x16xf32>
    %18 = arith.addf %17, %16 : vector<128x16xf32>
    %19 = arith.divf %17, %18 : vector<128x16xf32>
    %c0_13 = arith.constant 0 : index
    %c0_14 = arith.constant 0 : index
    %20 = vector.load %arg6[%c0_13, %c0_14] : memref<128x16xf32, #tpu.memory_space<vmem>>, vector<128x16xf32>
    tpu.vector_store %arg6[%c0_13, %c0_14], %19 {strides = array<i32>} : memref<128x16xf32, #tpu.memory_space<vmem>>, vector<128x16xf32>,
    return
  }
  func.func @transform_0(%arg0: i32) -> (i32, i32) {
    %c0_i32 = arith.constant 0 : i32
    %c0_i32_0 = arith.constant 0 : i32
    return %arg0, %c0_i32 : i32, i32
  }
  func.func @transform_1(%arg0: i32) -> (i32, i32) {
    %c0_i32 = arith.constant 0 : i32
    %c0_i32_0 = arith.constant 0 : i32
    %c0_i32_1 = arith.constant 0 : i32
    return %c0_i32, %c0_i32_0 : i32, i32
  }
  func.func @transform_2(%arg0: i32) -> (i32, i32) {
    %c0_i32 = arith.constant 0 : i32
    %c0_i32_0 = arith.constant 0 : i32
    %c0_i32_1 = arith.constant 0 : i32
    return %c0_i32, %c0_i32_0 : i32, i32
  }
  func.func @transform_3(%arg0: i32) -> (i32, i32) {
    %c0_i32 = arith.constant 0 : i32
    %c0_i32_0 = arith.constant 0 : i32
    %c0_i32_1 = arith.constant 0 : i32
    return %c0_i32, %c0_i32_0 : i32, i32
  }
  func.func @transform_4(%arg0: i32) -> (i32, i32) {
    %c0_i32 = arith.constant 0 : i32
    %c0_i32_0 = arith.constant 0 : i32
    %c0_i32_1 = arith.constant 0 : i32
    return %c0_i32, %c0_i32_0 : i32, i32
  }
  func.func @transform_5(%arg0: i32) -> (i32, i32) {
    %c0_i32 = arith.constant 0 : i32
    %c0_i32_0 = arith.constant 0 : i32
    return %arg0, %c0_i32 : i32, i32
  }
}

</mosaic_0001>

<llo_original>
// kernel: tpu_custom_call.1
$region0: #{tpu_custom_call.1}
  #allocation0 [shape = 'u32[]', space=smem, size = 0x4, offset = 0x4, fixed_abs, tag = 'smem constant byte address 0x4 - core index']
  #allocation1 [shape = 'u32[72,128]{1,0:T(1,128)}', space=vmem, size = 0x9000, scoped, tag = 'internal scratch']
  %s0 = inlined_call_operand.hbm [shape: f32[256,128], index: 0, kind: input, shape index: {}]
  %s1 = inlined_call_operand.vmem [shape: f32[128,32], index: 1, kind: input, shape index: {}]
  %s2 = inlined_call_operand.vmem [shape: f32[1,32], index: 2, kind: input, shape index: {}]
  %s3 = inlined_call_operand.vmem [shape: f32[32,16], index: 3, kind: input, shape index: {}]
  %s4 = inlined_call_operand.vmem [shape: f32[1,16], index: 4, kind: input, shape index: {}]
  %s5 = inlined_call_operand.vmem [shape: f32[256,16], index: 5, kind: output, shape index: {}]
  %s6 = sld [smem:[#allocation0]]
  $region57: #{tpu_custom_call.1} parent=0
    _
  %s8 = ssub.s32 1, %s6
  %s9 = scalar_select 0, %s8, %s6
  $region1: #{tpu_custom_call.1} parent=0
    #allocation2 [shape = 'u8[131072]{0}', space=vmem, size = 0x20000, scoped, tag = 'input window, operand 0']
    #allocation3 [shape = 's32[2]{0}', space=sflag, size = 0x8, scoped, tag = 'scoped memory for tpu_custom_call.1']
    %10 = vsyncpa [#allocation3], 0
    %s11 = scalar_lea.sflag [#allocation3], 1
    %12 = vsyncpa %s11, 0
    loop: start=0, step=1, limit=4
    $region2: #{tpu_custom_call.1} parent=1 // loop_pre_header
      _
    $region3: #{tpu_custom_call.1} parent=1 // loop_header
      %s14 = sphi 0, %s18
      %p15 = scmp.ge.s32.totalorder %s14, 4
      %s24 = sphi 0, %s26
      %s27 = sphi 0, %s24
      %s28 = sphi 0, %s27
      %s44 = sphi 0, %s28
      %s48 = sphi 0, %s48
      %s50 = sphi 0, %s48
      %s51 = sphi 0, %s50
      %s65 = sphi 0, %s51
      %s69 = sphi 0, %s69
      %s71 = sphi 0, %s69
      %s72 = sphi 0, %s71
      %s86 = sphi 0, %s72
      %s90 = sphi 0, %s90
      %s92 = sphi 0, %s90
      %s93 = sphi 0, %s92
      %s107 = sphi 0, %s93
      %s111 = sphi 0, %s111
      %s113 = sphi 0, %s111
      %s114 = sphi 0, %s113
      %s128 = sphi 0, %s114
      %s134 = sphi 0, %s136
      %s137 = sphi 0, %s134
      %s138 = sphi 0, %s137
      %s154 = sphi 0, %s138
    $region4: #{tpu_custom_call.1} parent=1 // loop_header_branch
      %17 = sbr.rel (%p15) target = $region8
    $region5: #{tpu_custom_call.1} parent=1 // loop_body
      %s19 = ssub.s32 %s14, 1
      %s20 = ssub.s32 %s14, 2
      %s21 = sadd.s32 %s14, 1
      %s22 = ssub.s32 %s14, %s21
      %p23 = scmp.eq.s32.totalorder %s22, 0
      %s25 = sadd.s32 %s24, 1
      %s26 = scalar_select %p23, %s24, %s25
      %p29 = pneg %p23
      %p30 = scmp.eq.s32.totalorder %s14, 1
      %p31 = por %p29, %p30
      %p32 = scmp.ne.s32.totalorder %s24, %s27
      %p33 = scmp.eq.s32.totalorder %s14, 0
      %p34 = por %p32, %p33
      %p35 = scmp.ne.s32.totalorder %s24, %s27
      %p36 = scmp.eq.s32.totalorder %s19, 1
      %p37 = por %p35, %p36
      %p38 = scmp.ne.s32.totalorder %s27, %s28
      %p39 = scmp.eq.s32.totalorder %s19, 0
      %p40 = por %p38, %p39
      %p41 = scmp.ne.s32.totalorder %s27, %s28
      %p42 = scmp.eq.s32.totalorder %s20, 1
      %p43 = por %p41, %p42
      %p45 = scmp.ne.s32.totalorder %s28, %s44
      %p46 = scmp.eq.s32.totalorder %s20, 0
      %p47 = por %p45, %p46
      %s49 = sadd.s32 %s48, 1
      %p52 = scmp.eq.s32.totalorder %s14, 1
      %p53 = scmp.ne.s32.totalorder %s48, %s50
      %p54 = scmp.eq.s32.totalorder %s14, 0
      %p55 = por %p53, %p54
      %p56 = scmp.ne.s32.totalorder %s48, %s50
      %p57 = scmp.eq.s32.totalorder %s19, 1
      %p58 = por %p56, %p57
      %p59 = scmp.ne.s32.totalorder %s50, %s51
      %p60 = scmp.eq.s32.totalorder %s19, 0
      %p61 = por %p59, %p60
      %p62 = scmp.ne.s32.totalorder %s50, %s51
      %p63 = scmp.eq.s32.totalorder %s20, 1
      %p64 = por %p62, %p63
      %p66 = scmp.ne.s32.totalorder %s51, %s65
      %p67 = scmp.eq.s32.totalorder %s20, 0
      %p68 = por %p66, %p67
      %s70 = sadd.s32 %s69, 1
      %p73 = scmp.eq.s32.totalorder %s14, 1
      %p74 = scmp.ne.s32.totalorder %s69, %s71
      %p75 = scmp.eq.s32.totalorder %s14, 0
      %p76 = por %p74, %p75
      %p77 = scmp.ne.s32.totalorder %s69, %s71
      %p78 = scmp.eq.s32.totalorder %s19, 1
      %p79 = por %p77, %p78
      %p80 = scmp.ne.s32.totalorder %s71, %s72
      %p81 = scmp.eq.s32.totalorder %s19, 0
      %p82 = por %p80, %p81
      %p83 = scmp.ne.s32.totalorder %s71, %s72
      %p84 = scmp.eq.s32.totalorder %s20, 1
      %p85 = por %p83, %p84
      %p87 = scmp.ne.s32.totalorder %s72, %s86
      %p88 = scmp.eq.s32.totalorder %s20, 0
      %p89 = por %p87, %p88
      %s91 = sadd.s32 %s90, 1
      %p94 = scmp.eq.s32.totalorder %s14, 1
      %p95 = scmp.ne.s32.totalorder %s90, %s92
      %p96 = scmp.eq.s32.totalorder %s14, 0
      %p97 = por %p95, %p96
      %p98 = scmp.ne.s32.totalorder %s90, %s92
      %p99 = scmp.eq.s32.totalorder %s19, 1
      %p100 = por %p98, %p99
      %p101 = scmp.ne.s32.totalorder %s92, %s93
      %p102 = scmp.eq.s32.totalorder %s19, 0
      %p103 = por %p101, %p102
      %p104 = scmp.ne.s32.totalorder %s92, %s93
      %p105 = scmp.eq.s32.totalorder %s20, 1
      %p106 = por %p104, %p105
      %p108 = scmp.ne.s32.totalorder %s93, %s107
      %p109 = scmp.eq.s32.totalorder %s20, 0
      %p110 = por %p108, %p109
      %s112 = sadd.s32 %s111, 1
      %p115 = scmp.eq.s32.totalorder %s14, 1
      %p116 = scmp.ne.s32.totalorder %s111, %s113
      %p117 = scmp.eq.s32.totalorder %s14, 0
      %p118 = por %p116, %p117
      %p119 = scmp.ne.s32.totalorder %s111, %s113
      %p120 = scmp.eq.s32.totalorder %s19, 1
      %p121 = por %p119, %p120
      %p122 = scmp.ne.s32.totalorder %s113, %s114
      %p123 = scmp.eq.s32.totalorder %s19, 0
      %p124 = por %p122, %p123
      %p125 = scmp.ne.s32.totalorder %s113, %s114
      %p126 = scmp.eq.s32.totalorder %s20, 1
      %p127 = por %p125, %p126
      %p129 = scmp.ne.s32.totalorder %s114, %s128
      %p130 = scmp.eq.s32.totalorder %s20, 0
      %p131 = por %p129, %p130
      %s132 = ssub.s32 %s14, %s21
      %p133 = scmp.eq.s32.totalorder %s132, 0
      %s135 = sadd.s32 %s134, 1
      %s136 = scalar_select %p133, %s134, %s135
      %p139 = pneg %p133
      %p140 = scmp.eq.s32.totalorder %s14, 1
      %p141 = por %p139, %p140
      %p142 = scmp.ne.s32.totalorder %s134, %s137
      %p143 = scmp.eq.s32.totalorder %s14, 0
      %p144 = por %p142, %p143
      %p145 = scmp.ne.s32.totalorder %s134, %s137
      %p146 = scmp.eq.s32.totalorder %s19, 1
      %p147 = por %p145, %p146
      %p148 = scmp.ne.s32.totalorder %s137, %s138
      %p149 = scmp.eq.s32.totalorder %s19, 0
      %p150 = por %p148, %p149
      %p151 = scmp.ne.s32.totalorder %s137, %s138
      %p152 = scmp.eq.s32.totalorder %s20, 1
      %p153 = por %p151, %p152
      %p155 = scmp.ne.s32.totalorder %s138, %s154
      %p156 = scmp.eq.s32.totalorder %s20, 0
      %p157 = por %p155, %p156
      %p158 = scmp.le.s32.totalorder 1, %s14
      %p159 = scmp.lt.s32.totalorder %s14, 3
      %p160 = pnand %p158, %p159
      %p161 = pneg %p160
      // Predicated region
      $region9: #{tpu_custom_call.1} parent=5 // pred_check
        _
      $region10: #{tpu_custom_call.1} parent=5 // pred_check_branch
        %163 = sbr.rel (%p160) target = $region12
      $region11: #{tpu_custom_call.1} parent=5 // pred_region
        %s164 = ssub.s32 %s14, 1
        // Predicated region
        $region13: #{tpu_custom_call.1} parent=11 // pred_check
          %p165 = pneg %p61
        $region14: #{tpu_custom_call.1} parent=11 // pred_check_branch
          %167 = sbr.rel (%p165) target = $region16
        $region15: #{tpu_custom_call.1} parent=11 // pred_region
          _
        $region16: #{tpu_custom_call.1} parent=11 // pred_fallthru
          _
        // Predicated region
        $region17: #{tpu_custom_call.1} parent=11 // pred_check
          %p168 = pneg %p82
        $region18: #{tpu_custom_call.1} parent=11 // pred_check_branch
          %170 = sbr.rel (%p168) target = $region20
        $region19: #{tpu_custom_call.1} parent=11 // pred_region
          _
        $region20: #{tpu_custom_call.1} parent=11 // pred_fallthru
          _
        // Predicated region
        $region21: #{tpu_custom_call.1} parent=11 // pred_check
          %p171 = pneg %p103
        $region22: #{tpu_custom_call.1} parent=11 // pred_check_branch
          %173 = sbr.rel (%p171) target = $region24
        $region23: #{tpu_custom_call.1} parent=11 // pred_region
          _
        $region24: #{tpu_custom_call.1} parent=11 // pred_fallthru
          _
        // Predicated region
        $region25: #{tpu_custom_call.1} parent=11 // pred_check
          %p174 = pneg %p124
        $region26: #{tpu_custom_call.1} parent=11 // pred_check_branch
          %176 = sbr.rel (%p174) target = $region28
        $region27: #{tpu_custom_call.1} parent=11 // pred_region
          _
        $region28: #{tpu_custom_call.1} parent=11 // pred_fallthru
          _
      $region12: #{tpu_custom_call.1} parent=5 // pred_fallthru
        _
      %p177 = scmp.lt.s32.totalorder %s14, 2
      // Predicated region
      $region29: #{tpu_custom_call.1} parent=5 // pred_check
        %p178 = pneg %p177
      $region30: #{tpu_custom_call.1} parent=5 // pred_check_branch
        %180 = sbr.rel (%p178) target = $region32
      $region31: #{tpu_custom_call.1} parent=5 // pred_region
        // Predicated region
        $region33: #{tpu_custom_call.1} parent=31 // pred_check
          %p181 = pneg %p34
        $region34: #{tpu_custom_call.1} parent=31 // pred_check_branch
          %183 = sbr.rel (%p181) target = $region36
        $region35: #{tpu_custom_call.1} parent=31 // pred_region
          %s184 = sand.u32 %s24, 1
          %s185 = scalar_lea.sflag [#allocation3], %s184
          %s186 = sand.u32 %s24, 1
          %s187 = smul.addr %s186, 128
          %s188 = scalar_lea.vmem [#allocation2], %s187
          %s189 = smul.u32 16, %s14
          %191 = vsyncadd %s185, 0
          %s192 = smul.addr %s189, 8
          %s193 = scalar_lea.hbm %s0, %s192
          %s194 = sshll.u32 %s193, 4
          %s195 = int_to_ptr.hbm [resolvable:$true] %s194
          %s196 = sshll.u32 %s188, 4
          %s197 = int_to_ptr.vmem [resolvable:$true] %s196
          %202 = dma.hbm_to_vmem [thread:$0]  %s195, 2048, %s197, %s185, 128, 128, 8
        $region36: #{tpu_custom_call.1} parent=31 // pred_fallthru
          _
      $region32: #{tpu_custom_call.1} parent=5 // pred_fallthru
        _
      %p203 = scmp.le.s32.totalorder 1, %s14
      %p204 = scmp.lt.s32.totalorder %s14, 3
      %p205 = pnand %p203, %p204
      %p206 = pneg %p205
      // Predicated region
      $region37: #{tpu_custom_call.1} parent=5 // pred_check
        _
      $region38: #{tpu_custom_call.1} parent=5 // pred_check_branch
        %208 = sbr.rel (%p205) target = $region40
      $region39: #{tpu_custom_call.1} parent=5 // pred_region
        %s209 = ssub.s32 %s14, 1
        %s210 = sand.u32 %s27, 1
        %s211 = scalar_lea.sflag [#allocation3], %s210
        %s212 = sand.u32 %s27, 1
        %s213 = smul.addr %s212, 128
        %s214 = scalar_lea.vmem [#allocation2], %s213
        // Predicated region
        $region41: #{tpu_custom_call.1} parent=39 // pred_check
          %p215 = pneg %p40
        $region42: #{tpu_custom_call.1} parent=39 // pred_check_branch
          %217 = sbr.rel (%p215) target = $region44
        $region43: #{tpu_custom_call.1} parent=39 // pred_region
          %219 = dma.done %s211, 2048
        $region44: #{tpu_custom_call.1} parent=39 // pred_fallthru
          _
        %s220 = sand.u32 %s27, 1
        %s221 = scalar_lea.sflag [#allocation3], %s220
        %s222 = sand.u32 %s27, 1
        %s223 = smul.addr %s222, 128
        %s224 = scalar_lea.vmem [#allocation2], %s223
        %p225 = pneg %p40
        %p226 = pneg %p37
        %p227 = pneg %p61
        %p228 = pneg %p58
        %p229 = pneg %p82
        %p230 = pneg %p79
        %p231 = pneg %p103
        %p232 = pneg %p100
        %p233 = pneg %p124
        %p234 = pneg %p121
        %p235 = pneg %p150
        %p236 = pneg %p147
        %s237 = smul.u32 16, %s19
        %p238 = scmp.lt.s32.totalorder %s237, 31
        %s239 = scalar_select %p238, %s237, 31
        %s240 = smul.addr %s239, 8
        %s241 = scalar_lea.vmem %s5, %s240
        %s242 = smul.u32 16, %s19
        %s243 = smul.u32 16, %s19
        %p244 = scmp.lt.s32.totalorder %s243, 31
        %s245 = scalar_select %p244, %s243, 31
        %s246 = smul.addr %s245, 8
        %s247 = scalar_lea.vmem %s5, %s246
        %s248 = smul.u32 16, %s19
        %v249 = vld [vmem:[%s214] sm:$0xff]
        %v250 = vld [vmem:[%s214 + $0x8] sm:$0xff]
        %v251 = vld [vmem:[%s214 + $0x10] sm:$0xff]
        %v252 = vld [vmem:[%s214 + $0x18] sm:$0xff]
        %v253 = vld [vmem:[%s214 + $0x20] sm:$0xff]
        %v254 = vld [vmem:[%s214 + $0x28] sm:$0xff]
        %v255 = vld [vmem:[%s214 + $0x30] sm:$0xff]
        %v256 = vld [vmem:[%s214 + $0x38] sm:$0xff]
        %v257 = vld [vmem:[%s214 + $0x40] sm:$0xff]
        %v258 = vld [vmem:[%s214 + $0x48] sm:$0xff]
        %v259 = vld [vmem:[%s214 + $0x50] sm:$0xff]
        %v260 = vld [vmem:[%s214 + $0x58] sm:$0xff]
        %v261 = vld [vmem:[%s214 + $0x60] sm:$0xff]
        %v262 = vld [vmem:[%s214 + $0x68] sm:$0xff]
        %v263 = vld [vmem:[%s214 + $0x70] sm:$0xff]
        %v264 = vld [vmem:[%s214 + $0x78] sm:$0xff]
        %v265 = vld [vmem:[%s1] sm:$0xff]
        %v266 = vld [vmem:[%s1 + $0x8] sm:$0xff]
        %v267 = vld [vmem:[%s1 + $0x10] sm:$0xff]
        %v268 = vld [vmem:[%s1 + $0x18] sm:$0xff]
        %v269 = vld [vmem:[%s1 + $0x20] sm:$0xff]
        %v270 = vld [vmem:[%s1 + $0x28] sm:$0xff]
        %v271 = vld [vmem:[%s1 + $0x30] sm:$0xff]
        %v272 = vld [vmem:[%s1 + $0x38] sm:$0xff]
        %v273 = vld [vmem:[%s1 + $0x40] sm:$0xff]
        %v274 = vld [vmem:[%s1 + $0x48] sm:$0xff]
        %v275 = vld [vmem:[%s1 + $0x50] sm:$0xff]
        %v276 = vld [vmem:[%s1 + $0x58] sm:$0xff]
        %v277 = vld [vmem:[%s1 + $0x60] sm:$0xff]
        %v278 = vld [vmem:[%s1 + $0x68] sm:$0xff]
        %v279 = vld [vmem:[%s1 + $0x70] sm:$0xff]
        %v280 = vld [vmem:[%s1 + $0x78] sm:$0xff]
        %v281 = vld [vmem:[%s2] sm:$0x1]
        %v283 = vperm.slane %v281, 0
        %285 = vmatpush.msra.mxu0 %v280
        %286 = vmatpush.msra.mxu0 %v279
        %287 = vmatpush.msra.mxu0 %v278
        %288 = vmatpush.msra.mxu0 %v277
        %289 = vmatpush.msra.mxu0 %v276
        %290 = vmatpush.msra.mxu0 %v275
        %291 = vmatpush.msra.mxu0 %v274
        %292 = vmatpush.msra.mxu0 %v273
        %293 = vmatpush.msra.mxu0 %v272
        %294 = vmatpush.msra.mxu0 %v271
        %295 = vmatpush.msra.mxu0 %v270
        %296 = vmatpush.msra.mxu0 %v269
        %297 = vmatpush.msra.mxu0 %v268
        %298 = vmatpush.msra.mxu0 %v267
        %299 = vmatpush.msra.mxu0 %v266
        %300 = vmatpush.msra.mxu0 %v265
        %301 = vmatmul.f32.gmra.mxu0 %v249
        %v302 = vpop.f32.mrf.mxu0
        %v303 = vadd.f32 %v283, %v302
        %304 = vmatmul.f32.gmra.mxu0 %v250
        %v305 = vpop.f32.mrf.mxu0
        %v306 = vadd.f32 %v283, %v305
        %307 = vmatmul.f32.gmra.mxu0 %v251
        %v308 = vpop.f32.mrf.mxu0
        %v309 = vadd.f32 %v283, %v308
        %310 = vmatmul.f32.gmra.mxu0 %v252
        %v311 = vpop.f32.mrf.mxu0
        %v312 = vadd.f32 %v283, %v311
        %313 = vmatmul.f32.gmra.mxu0 %v253
        %v314 = vpop.f32.mrf.mxu0
        %v315 = vadd.f32 %v283, %v314
        %316 = vmatmul.f32.gmra.mxu0 %v254
        %v317 = vpop.f32.mrf.mxu0
        %v318 = vadd.f32 %v283, %v317
        %319 = vmatmul.f32.gmra.mxu0 %v255
        %v320 = vpop.f32.mrf.mxu0
        %v321 = vadd.f32 %v283, %v320
        %322 = vmatmul.f32.gmra.mxu0 %v256
        %v323 = vpop.f32.mrf.mxu0
        %v324 = vadd.f32 %v283, %v323
        %325 = vmatmul.f32.gmra.mxu0 %v257
        %v326 = vpop.f32.mrf.mxu0
        %v327 = vadd.f32 %v283, %v326
        %328 = vmatmul.f32.gmra.mxu0 %v258
        %v329 = vpop.f32.mrf.mxu0
        %v330 = vadd.f32 %v283, %v329
        %331 = vmatmul.f32.gmra.mxu0 %v259
        %v332 = vpop.f32.mrf.mxu0
        %v333 = vadd.f32 %v283, %v332
        %334 = vmatmul.f32.gmra.mxu0 %v260
        %v335 = vpop.f32.mrf.mxu0
        %v336 = vadd.f32 %v283, %v335
        %337 = vmatmul.f32.gmra.mxu0 %v261
        %v338 = vpop.f32.mrf.mxu0
        %v339 = vadd.f32 %v283, %v338
        %340 = vmatmul.f32.gmra.mxu0 %v262
        %v341 = vpop.f32.mrf.mxu0
        %v342 = vadd.f32 %v283, %v341
        %343 = vmatmul.f32.gmra.mxu0 %v263
        %v344 = vpop.f32.mrf.mxu0
        %v345 = vadd.f32 %v283, %v344
        %346 = vmatmul.f32.gmra.mxu0 %v264
        %v347 = vpop.f32.mrf.mxu0
        %v348 = vadd.f32 %v283, %v347
        %349 = vdwg.mxu0
        %v350 = vmax.f32 %v303, 0.0
        %v351 = vmax.f32 %v306, 0.0
        %v352 = vmax.f32 %v309, 0.0
        %v353 = vmax.f32 %v312, 0.0
        %v354 = vmax.f32 %v315, 0.0
        %v355 = vmax.f32 %v318, 0.0
        %v356 = vmax.f32 %v321, 0.0
        %v357 = vmax.f32 %v324, 0.0
        %v358 = vmax.f32 %v327, 0.0
        %v359 = vmax.f32 %v330, 0.0
        %v360 = vmax.f32 %v333, 0.0
        %v361 = vmax.f32 %v336, 0.0
        %v362 = vmax.f32 %v339, 0.0
        %v363 = vmax.f32 %v342, 0.0
        %v364 = vmax.f32 %v345, 0.0
        %v365 = vmax.f32 %v348, 0.0
        %v366 = vld [vmem:[%s3] sm:$0xff]
        %v367 = vld [vmem:[%s3 + $0x8] sm:$0xff]
        %v368 = vld [vmem:[%s3 + $0x10] sm:$0xff]
        %v369 = vld [vmem:[%s3 + $0x18] sm:$0xff]
        %v370 = vld [vmem:[%s4] sm:$0x1]
        %v372 = vperm.slane %v370, 0
        %vm374 = vcmask 261120
        %v376 = vsel %vm374, %v350, 0
        %v379 = vsel %vm374, %v351, 0
        %v382 = vsel %vm374, %v352, 0
        %v385 = vsel %vm374, %v353, 0
        %v388 = vsel %vm374, %v354, 0
        %v391 = vsel %vm374, %v355, 0
        %v394 = vsel %vm374, %v356, 0
        %v397 = vsel %vm374, %v357, 0
        %v400 = vsel %vm374, %v358, 0
        %v403 = vsel %vm374, %v359, 0
        %v406 = vsel %vm374, %v360, 0
        %v409 = vsel %vm374, %v361, 0
        %v412 = vsel %vm374, %v362, 0
        %v415 = vsel %vm374, %v363, 0
        %v418 = vsel %vm374, %v364, 0
        %v421 = vsel %vm374, %v365, 0
        %423 = vmatpush.msra.mxu0 0.0
        %424 = vmatpush.msra.mxu0 0.0
        %425 = vmatpush.msra.mxu0 0.0
        %426 = vmatpush.msra.mxu0 0.0
        %427 = vmatpush.msra.mxu0 0.0
        %428 = vmatpush.msra.mxu0 0.0
        %429 = vmatpush.msra.mxu0 0.0
        %430 = vmatpush.msra.mxu0 0.0
        %431 = vmatpush.msra.mxu0 0.0
        %432 = vmatpush.msra.mxu0 0.0
        %433 = vmatpush.msra.mxu0 0.0
        %434 = vmatpush.msra.mxu0 0.0
        %435 = vmatpush.msra.mxu0 %v369
        %436 = vmatpush.msra.mxu0 %v368
        %437 = vmatpush.msra.mxu0 %v367
        %438 = vmatpush.msra.mxu0 %v366
        %439 = vmatmul.f32.gmra.mxu0 %v376
        %v440 = vpop.f32.mrf.mxu0
        %v441 = vadd.f32 %v372, %v440
        %442 = vmatmul.f32.gmra.mxu0 %v379
        %v443 = vpop.f32.mrf.mxu0
        %v444 = vadd.f32 %v372, %v443
        %445 = vmatmul.f32.gmra.mxu0 %v382
        %v446 = vpop.f32.mrf.mxu0
        %v447 = vadd.f32 %v372, %v446
        %448 = vmatmul.f32.gmra.mxu0 %v385
        %v449 = vpop.f32.mrf.mxu0
        %v450 = vadd.f32 %v372, %v449
        %451 = vmatmul.f32.gmra.mxu0 %v388
        %v452 = vpop.f32.mrf.mxu0
        %v453 = vadd.f32 %v372, %v452
        %454 = vmatmul.f32.gmra.mxu0 %v391
        %v455 = vpop.f32.mrf.mxu0
        %v456 = vadd.f32 %v372, %v455
        %457 = vmatmul.f32.gmra.mxu0 %v394
        %v458 = vpop.f32.mrf.mxu0
        %v459 = vadd.f32 %v372, %v458
        %460 = vmatmul.f32.gmra.mxu0 %v397
        %v461 = vpop.f32.mrf.mxu0
        %v462 = vadd.f32 %v372, %v461
        %463 = vmatmul.f32.gmra.mxu0 %v400
        %v464 = vpop.f32.mrf.mxu0
        %v465 = vadd.f32 %v372, %v464
        %466 = vmatmul.f32.gmra.mxu0 %v403
        %v467 = vpop.f32.mrf.mxu0
        %v468 = vadd.f32 %v372, %v467
        %469 = vmatmul.f32.gmra.mxu0 %v406
        %v470 = vpop.f32.mrf.mxu0
        %v471 = vadd.f32 %v372, %v470
        %472 = vmatmul.f32.gmra.mxu0 %v409
        %v473 = vpop.f32.mrf.mxu0
        %v474 = vadd.f32 %v372, %v473
        %475 = vmatmul.f32.gmra.mxu0 %v412
        %v476 = vpop.f32.mrf.mxu0
        %v477 = vadd.f32 %v372, %v476
        %478 = vmatmul.f32.gmra.mxu0 %v415
        %v479 = vpop.f32.mrf.mxu0
        %v480 = vadd.f32 %v372, %v479
        %481 = vmatmul.f32.gmra.mxu0 %v418
        %v482 = vpop.f32.mrf.mxu0
        %v483 = vadd.f32 %v372, %v482
        %484 = vmatmul.f32.gmra.mxu0 %v421
        %v485 = vpop.f32.mrf.mxu0
        %v486 = vadd.f32 %v372, %v485
        %487 = vdwg.mxu0
        %v488 = vmax.f32 %v441, 0.0
        %v489 = vmax.f32 %v444, 0.0
        %v490 = vmax.f32 %v447, 0.0
        %v491 = vmax.f32 %v450, 0.0
        %v492 = vmax.f32 %v453, 0.0
        %v493 = vmax.f32 %v456, 0.0
        %v494 = vmax.f32 %v459, 0.0
        %v495 = vmax.f32 %v462, 0.0
        %v496 = vmax.f32 %v465, 0.0
        %v497 = vmax.f32 %v468, 0.0
        %v498 = vmax.f32 %v471, 0.0
        %v499 = vmax.f32 %v474, 0.0
        %v500 = vmax.f32 %v477, 0.0
        %v501 = vmax.f32 %v480, 0.0
        %v502 = vmax.f32 %v483, 0.0
        %v503 = vmax.f32 %v486, 0.0
        %v504 = vxor.u32 %v488, 2147483648
        %v505 = vxor.u32 %v489, 2147483648
        %v506 = vxor.u32 %v490, 2147483648
        %v507 = vxor.u32 %v491, 2147483648
        %v508 = vxor.u32 %v492, 2147483648
        %v509 = vxor.u32 %v493, 2147483648
        %v510 = vxor.u32 %v494, 2147483648
        %v511 = vxor.u32 %v495, 2147483648
        %v512 = vxor.u32 %v496, 2147483648
        %v513 = vxor.u32 %v497, 2147483648
        %v514 = vxor.u32 %v498, 2147483648
        %v515 = vxor.u32 %v499, 2147483648
        %v516 = vxor.u32 %v500, 2147483648
        %v517 = vxor.u32 %v501, 2147483648
        %v518 = vxor.u32 %v502, 2147483648
        %v519 = vxor.u32 %v503, 2147483648
        %v520 = vmul.f32 %v504, 1.442695
        %v521 = vpow.pop %v520
        %v522 = vmul.f32 %v505, 1.442695
        %v523 = vpow.pop %v522
        %v524 = vmul.f32 %v506, 1.442695
        %v525 = vpow.pop %v524
        %v526 = vmul.f32 %v507, 1.442695
        %v527 = vpow.pop %v526
        %v528 = vmul.f32 %v508, 1.442695
        %v529 = vpow.pop %v528
        %v530 = vmul.f32 %v509, 1.442695
        %v531 = vpow.pop %v530
        %v532 = vmul.f32 %v510, 1.442695
        %v533 = vpow.pop %v532
        %v534 = vmul.f32 %v511, 1.442695
        %v535 = vpow.pop %v534
        %v536 = vmul.f32 %v512, 1.442695
        %v537 = vpow.pop %v536
        %v538 = vmul.f32 %v513, 1.442695
        %v539 = vpow.pop %v538
        %v540 = vmul.f32 %v514, 1.442695
        %v541 = vpow.pop %v540
        %v542 = vmul.f32 %v515, 1.442695
        %v543 = vpow.pop %v542
        %v544 = vmul.f32 %v516, 1.442695
        %v545 = vpow.pop %v544
        %v546 = vmul.f32 %v517, 1.442695
        %v547 = vpow.pop %v546
        %v548 = vmul.f32 %v518, 1.442695
        %v549 = vpow.pop %v548
        %v550 = vmul.f32 %v519, 1.442695
        %v551 = vpow.pop %v550
        %v552 = vadd.f32 %v521, 1.0
        %v553 = vadd.f32 %v523, 1.0
        %v554 = vadd.f32 %v525, 1.0
        %v555 = vadd.f32 %v527, 1.0
        %v556 = vadd.f32 %v529, 1.0
        %v557 = vadd.f32 %v531, 1.0
        %v558 = vadd.f32 %v533, 1.0
        %v559 = vadd.f32 %v535, 1.0
        %v560 = vadd.f32 %v537, 1.0
        %v561 = vadd.f32 %v539, 1.0
        %v562 = vadd.f32 %v541, 1.0
        %v563 = vadd.f32 %v543, 1.0
        %v564 = vadd.f32 %v545, 1.0
        %v565 = vadd.f32 %v547, 1.0
        %v566 = vadd.f32 %v549, 1.0
        %v567 = vadd.f32 %v551, 1.0
        %v568 = vrcp.pop %v552
        %v569 = vmul.f32 %v552, %v568
        %v570 = vsub.f32 1.0, %v569
        %v571 = vmul.f32 %v568, %v570
        %v572 = vadd.f32 %v568, %v571
        %vm573 = vweird.f32 %v552
        %vm574 = vweird.f32 %v568
        %vm575 = vmor %vm573, %vm574
        %v576 = vsel %vm575, %v568, %v572
        %v577 = vand.u32 2147483647, %v552
        %vm578 = vcmp.eq.f32.partialorder %v577, 8.507059e+37
        %v579 = vand.u32 %v552, 2147483648
        %v580 = vor.u32 1.1754944e-38, %v579
        %v581 = vsel %vm578, %v580, %v576
        %v582 = vmul.f32 1.0, %v581
        %v583 = vrcp.pop %v553
        %v584 = vmul.f32 %v553, %v583
        %v585 = vsub.f32 1.0, %v584
        %v586 = vmul.f32 %v583, %v585
        %v587 = vadd.f32 %v583, %v586
        %vm588 = vweird.f32 %v553
        %vm589 = vweird.f32 %v583
        %vm590 = vmor %vm588, %vm589
        %v591 = vsel %vm590, %v583, %v587
        %v592 = vand.u32 2147483647, %v553
        %vm593 = vcmp.eq.f32.partialorder %v592, 8.507059e+37
        %v594 = vand.u32 %v553, 2147483648
        %v595 = vor.u32 1.1754944e-38, %v594
        %v596 = vsel %vm593, %v595, %v591
        %v597 = vmul.f32 1.0, %v596
        %v598 = vrcp.pop %v554
        %v599 = vmul.f32 %v554, %v598
        %v600 = vsub.f32 1.0, %v599
        %v601 = vmul.f32 %v598, %v600
        %v602 = vadd.f32 %v598, %v601
        %vm603 = vweird.f32 %v554
        %vm604 = vweird.f32 %v598
        %vm605 = vmor %vm603, %vm604
        %v606 = vsel %vm605, %v598, %v602
        %v607 = vand.u32 2147483647, %v554
        %vm608 = vcmp.eq.f32.partialorder %v607, 8.507059e+37
        %v609 = vand.u32 %v554, 2147483648
        %v610 = vor.u32 1.1754944e-38, %v609
        %v611 = vsel %vm608, %v610, %v606
        %v612 = vmul.f32 1.0, %v611
        %v613 = vrcp.pop %v555
        %v614 = vmul.f32 %v555, %v613
        %v615 = vsub.f32 1.0, %v614
        %v616 = vmul.f32 %v613, %v615
        %v617 = vadd.f32 %v613, %v616
        %vm618 = vweird.f32 %v555
        %vm619 = vweird.f32 %v613
        %vm620 = vmor %vm618, %vm619
        %v621 = vsel %vm620, %v613, %v617
        %v622 = vand.u32 2147483647, %v555
        %vm623 = vcmp.eq.f32.partialorder %v622, 8.507059e+37
        %v624 = vand.u32 %v555, 2147483648
        %v625 = vor.u32 1.1754944e-38, %v624
        %v626 = vsel %vm623, %v625, %v621
        %v627 = vmul.f32 1.0, %v626
        %v628 = vrcp.pop %v556
        %v629 = vmul.f32 %v556, %v628
        %v630 = vsub.f32 1.0, %v629
        %v631 = vmul.f32 %v628, %v630
        %v632 = vadd.f32 %v628, %v631
        %vm633 = vweird.f32 %v556
        %vm634 = vweird.f32 %v628
        %vm635 = vmor %vm633, %vm634
        %v636 = vsel %vm635, %v628, %v632
        %v637 = vand.u32 2147483647, %v556
        %vm638 = vcmp.eq.f32.partialorder %v637, 8.507059e+37
        %v639 = vand.u32 %v556, 2147483648
        %v640 = vor.u32 1.1754944e-38, %v639
        %v641 = vsel %vm638, %v640, %v636
        %v642 = vmul.f32 1.0, %v641
        %v643 = vrcp.pop %v557
        %v644 = vmul.f32 %v557, %v643
        %v645 = vsub.f32 1.0, %v644
        %v646 = vmul.f32 %v643, %v645
        %v647 = vadd.f32 %v643, %v646
        %vm648 = vweird.f32 %v557
        %vm649 = vweird.f32 %v643
        %vm650 = vmor %vm648, %vm649
        %v651 = vsel %vm650, %v643, %v647
        %v652 = vand.u32 2147483647, %v557
        %vm653 = vcmp.eq.f32.partialorder %v652, 8.507059e+37
        %v654 = vand.u32 %v557, 2147483648
        %v655 = vor.u32 1.1754944e-38, %v654
        %v656 = vsel %vm653, %v655, %v651
        %v657 = vmul.f32 1.0, %v656
        %v658 = vrcp.pop %v558
        %v659 = vmul.f32 %v558, %v658
        %v660 = vsub.f32 1.0, %v659
        %v661 = vmul.f32 %v658, %v660
        %v662 = vadd.f32 %v658, %v661
        %vm663 = vweird.f32 %v558
        %vm664 = vweird.f32 %v658
        %vm665 = vmor %vm663, %vm664
        %v666 = vsel %vm665, %v658, %v662
        %v667 = vand.u32 2147483647, %v558
        %vm668 = vcmp.eq.f32.partialorder %v667, 8.507059e+37
        %v669 = vand.u32 %v558, 2147483648
        %v670 = vor.u32 1.1754944e-38, %v669
        %v671 = vsel %vm668, %v670, %v666
        %v672 = vmul.f32 1.0, %v671
        %v673 = vrcp.pop %v559
        %v674 = vmul.f32 %v559, %v673
        %v675 = vsub.f32 1.0, %v674
        %v676 = vmul.f32 %v673, %v675
        %v677 = vadd.f32 %v673, %v676
        %vm678 = vweird.f32 %v559
        %vm679 = vweird.f32 %v673
        %vm680 = vmor %vm678, %vm679
        %v681 = vsel %vm680, %v673, %v677
        %v682 = vand.u32 2147483647, %v559
        %vm683 = vcmp.eq.f32.partialorder %v682, 8.507059e+37
        %v684 = vand.u32 %v559, 2147483648
        %v685 = vor.u32 1.1754944e-38, %v684
        %v686 = vsel %vm683, %v685, %v681
        %v687 = vmul.f32 1.0, %v686
        %v688 = vrcp.pop %v560
        %v689 = vmul.f32 %v560, %v688
        %v690 = vsub.f32 1.0, %v689
        %v691 = vmul.f32 %v688, %v690
        %v692 = vadd.f32 %v688, %v691
        %vm693 = vweird.f32 %v560
        %vm694 = vweird.f32 %v688
        %vm695 = vmor %vm693, %vm694
        %v696 = vsel %vm695, %v688, %v692
        %v697 = vand.u32 2147483647, %v560
        %vm698 = vcmp.eq.f32.partialorder %v697, 8.507059e+37
        %v699 = vand.u32 %v560, 2147483648
        %v700 = vor.u32 1.1754944e-38, %v699
        %v701 = vsel %vm698, %v700, %v696
        %v702 = vmul.f32 1.0, %v701
        %v703 = vrcp.pop %v561
        %v704 = vmul.f32 %v561, %v703
        %v705 = vsub.f32 1.0, %v704
        %v706 = vmul.f32 %v703, %v705
        %v707 = vadd.f32 %v703, %v706
        %vm708 = vweird.f32 %v561
        %vm709 = vweird.f32 %v703
        %vm710 = vmor %vm708, %vm709
        %v711 = vsel %vm710, %v703, %v707
        %v712 = vand.u32 2147483647, %v561
        %vm713 = vcmp.eq.f32.partialorder %v712, 8.507059e+37
        %v714 = vand.u32 %v561, 2147483648
        %v715 = vor.u32 1.1754944e-38, %v714
        %v716 = vsel %vm713, %v715, %v711
        %v717 = vmul.f32 1.0, %v716
        %v718 = vrcp.pop %v562
        %v719 = vmul.f32 %v562, %v718
        %v720 = vsub.f32 1.0, %v719
        %v721 = vmul.f32 %v718, %v720
        %v722 = vadd.f32 %v718, %v721
        %vm723 = vweird.f32 %v562
        %vm724 = vweird.f32 %v718
        %vm725 = vmor %vm723, %vm724
        %v726 = vsel %vm725, %v718, %v722
        %v727 = vand.u32 2147483647, %v562
        %vm728 = vcmp.eq.f32.partialorder %v727, 8.507059e+37
        %v729 = vand.u32 %v562, 2147483648
        %v730 = vor.u32 1.1754944e-38, %v729
        %v731 = vsel %vm728, %v730, %v726
        %v732 = vmul.f32 1.0, %v731
        %v733 = vrcp.pop %v563
        %v734 = vmul.f32 %v563, %v733
        %v735 = vsub.f32 1.0, %v734
        %v736 = vmul.f32 %v733, %v735
        %v737 = vadd.f32 %v733, %v736
        %vm738 = vweird.f32 %v563
        %vm739 = vweird.f32 %v733
        %vm740 = vmor %vm738, %vm739
        %v741 = vsel %vm740, %v733, %v737
        %v742 = vand.u32 2147483647, %v563
        %vm743 = vcmp.eq.f32.partialorder %v742, 8.507059e+37
        %v744 = vand.u32 %v563, 2147483648
        %v745 = vor.u32 1.1754944e-38, %v744
        %v746 = vsel %vm743, %v745, %v741
        %v747 = vmul.f32 1.0, %v746
        %v748 = vrcp.pop %v564
        %v749 = vmul.f32 %v564, %v748
        %v750 = vsub.f32 1.0, %v749
        %v751 = vmul.f32 %v748, %v750
        %v752 = vadd.f32 %v748, %v751
        %vm753 = vweird.f32 %v564
        %vm754 = vweird.f32 %v748
        %vm755 = vmor %vm753, %vm754
        %v756 = vsel %vm755, %v748, %v752
        %v757 = vand.u32 2147483647, %v564
        %vm758 = vcmp.eq.f32.partialorder %v757, 8.507059e+37
        %v759 = vand.u32 %v564, 2147483648
        %v760 = vor.u32 1.1754944e-38, %v759
        %v761 = vsel %vm758, %v760, %v756
        %v762 = vmul.f32 1.0, %v761
        %v763 = vrcp.pop %v565
        %v764 = vmul.f32 %v565, %v763
        %v765 = vsub.f32 1.0, %v764
        %v766 = vmul.f32 %v763, %v765
        %v767 = vadd.f32 %v763, %v766
        %vm768 = vweird.f32 %v565
        %vm769 = vweird.f32 %v763
        %vm770 = vmor %vm768, %vm769
        %v771 = vsel %vm770, %v763, %v767
        %v772 = vand.u32 2147483647, %v565
        %vm773 = vcmp.eq.f32.partialorder %v772, 8.507059e+37
        %v774 = vand.u32 %v565, 2147483648
        %v775 = vor.u32 1.1754944e-38, %v774
        %v776 = vsel %vm773, %v775, %v771
        %v777 = vmul.f32 1.0, %v776
        %v778 = vrcp.pop %v566
        %v779 = vmul.f32 %v566, %v778
        %v780 = vsub.f32 1.0, %v779
        %v781 = vmul.f32 %v778, %v780
        %v782 = vadd.f32 %v778, %v781
        %vm783 = vweird.f32 %v566
        %vm784 = vweird.f32 %v778
        %vm785 = vmor %vm783, %vm784
        %v786 = vsel %vm785, %v778, %v782
        %v787 = vand.u32 2147483647, %v566
        %vm788 = vcmp.eq.f32.partialorder %v787, 8.507059e+37
        %v789 = vand.u32 %v566, 2147483648
        %v790 = vor.u32 1.1754944e-38, %v789
        %v791 = vsel %vm788, %v790, %v786
        %v792 = vmul.f32 1.0, %v791
        %v793 = vrcp.pop %v567
        %v794 = vmul.f32 %v567, %v793
        %v795 = vsub.f32 1.0, %v794
        %v796 = vmul.f32 %v793, %v795
        %v797 = vadd.f32 %v793, %v796
        %vm798 = vweird.f32 %v567
        %vm799 = vweird.f32 %v793
        %vm800 = vmor %vm798, %vm799
        %v801 = vsel %vm800, %v793, %v797
        %v802 = vand.u32 2147483647, %v567
        %vm803 = vcmp.eq.f32.partialorder %v802, 8.507059e+37
        %v804 = vand.u32 %v567, 2147483648
        %v805 = vor.u32 1.1754944e-38, %v804
        %v806 = vsel %vm803, %v805, %v801
        %v807 = vmul.f32 1.0, %v806
        %vm808 = vcmask 130048
        %809 = vst.msk [vmem:[%s247] sm:$0xff] %vm808, %v582
        %810 = vst.msk [vmem:[%s247 + $0x8] sm:$0xff] %vm808, %v597
        %811 = vst.msk [vmem:[%s247 + $0x10] sm:$0xff] %vm808, %v612
        %812 = vst.msk [vmem:[%s247 + $0x18] sm:$0xff] %vm808, %v627
        %813 = vst.msk [vmem:[%s247 + $0x20] sm:$0xff] %vm808, %v642
        %814 = vst.msk [vmem:[%s247 + $0x28] sm:$0xff] %vm808, %v657
        %815 = vst.msk [vmem:[%s247 + $0x30] sm:$0xff] %vm808, %v672
        %816 = vst.msk [vmem:[%s247 + $0x38] sm:$0xff] %vm808, %v687
        %817 = vst.msk [vmem:[%s247 + $0x40] sm:$0xff] %vm808, %v702
        %818 = vst.msk [vmem:[%s247 + $0x48] sm:$0xff] %vm808, %v717
        %819 = vst.msk [vmem:[%s247 + $0x50] sm:$0xff] %vm808, %v732
        %820 = vst.msk [vmem:[%s247 + $0x58] sm:$0xff] %vm808, %v747
        %821 = vst.msk [vmem:[%s247 + $0x60] sm:$0xff] %vm808, %v762
        %822 = vst.msk [vmem:[%s247 + $0x68] sm:$0xff] %vm808, %v777
        %823 = vst.msk [vmem:[%s247 + $0x70] sm:$0xff] %vm808, %v792
        %824 = vst.msk [vmem:[%s247 + $0x78] sm:$0xff] %vm808, %v807
        %s825 = smul.u32 16, %s19
        %p826 = scmp.lt.s32.totalorder %s825, 31
        %s827 = scalar_select %p826, %s825, 31
        %s828 = smul.addr %s827, 8
        %s829 = scalar_lea.vmem %s5, %s828
        // Predicated region
        $region45: #{tpu_custom_call.1} parent=39 // pred_check
          %p830 = pneg %p147
        $region46: #{tpu_custom_call.1} parent=39 // pred_check_branch
          %832 = sbr.rel (%p830) target = $region48
        $region47: #{tpu_custom_call.1} parent=39 // pred_region
          %s833 = smul.u32 16, %s19
        $region48: #{tpu_custom_call.1} parent=39 // pred_fallthru
          _
      $region40: #{tpu_custom_call.1} parent=5 // pred_fallthru
        _
      %p834 = scmp.le.s32.totalorder 2, %s14
      // Predicated region
      $region49: #{tpu_custom_call.1} parent=5 // pred_check
        %p835 = pneg %p834
      $region50: #{tpu_custom_call.1} parent=5 // pred_check_branch
        %837 = sbr.rel (%p835) target = $region52
      $region51: #{tpu_custom_call.1} parent=5 // pred_region
        %s838 = ssub.s32 %s14, 2
        // Predicated region
        $region53: #{tpu_custom_call.1} parent=51 // pred_check
          %p839 = pneg %p153
        $region54: #{tpu_custom_call.1} parent=51 // pred_check_branch
          %841 = sbr.rel (%p839) target = $region56
        $region55: #{tpu_custom_call.1} parent=51 // pred_region
          %s842 = smul.u32 16, %s20
          %p843 = scmp.lt.s32.totalorder %s842, 31
          %s844 = scalar_select %p843, %s842, 31
          %s845 = smul.addr %s844, 8
          %s846 = scalar_lea.vmem %s5, %s845
        $region56: #{tpu_custom_call.1} parent=51 // pred_fallthru
          _
      $region52: #{tpu_custom_call.1} parent=5 // pred_fallthru
        _
    $region6: #{tpu_custom_call.1} parent=1 // loop_footer
      %s18 = sadd.s32 1, %s14
    $region7: #{tpu_custom_call.1} parent=1 // loop_footer_branch
      %13 = sbr.rel target = $region3
    $region8: #{tpu_custom_call.1} parent=1 // loop_exit
      _
    %847 = vsyncpa [#allocation3], 1
    %s848 = scalar_lea.sflag [#allocation3], 1
    %849 = vsyncpa %s848, 1

</llo_original>
